<compile_context>
chip_gen: v6e
topology: v6e:2x2x1
jax: 0.10.0
libtpu: 0.0.40
codegen_flags: <defaults>
</compile_context>

<pallas_src>
import jax
import jax.numpy as jnp
from jax import lax
from jax.experimental import pallas as pl
from jax.experimental.pallas import tpu as pltpu

IN_DIM = 300
MIDDLE_DIM = 100
OUT_DIM = 2

# Max batch-tile: x tile (TB x 384 padded lanes x 4 B x 2 buffers) ~= 12.6 MiB
# + lane-padded (TB x 128) output double-buffer ~= 4 MiB  -> ~16.6 MiB total.
_MAX_TB = 4096
_VMEM_LIMIT_BYTES = 48 << 20  # fits v5e/v6e (128 MiB phys) and v7x (64 MiB/TC)


def _fused_mlp_kernel(x_ref, wt_ref, bf_ref, o_ref):
    """out = relu(x @ W_fused_t^T + b_fused), computed on the VPU + XLU.

    With OUT_DIM == 2 an MXU matmul would be vex-slot bound; instead each
    output column is a sublane-broadcast multiply (VALU) + lane reduce (XLU),
    which are free slots relative to the memory-bound x stream.
    """
    x = x_ref[...]                      # (TB, IN_DIM) f32
    wt = wt_ref[...]                    # (OUT_DIM, IN_DIM) f32, VMEM-resident
    cols = []
    for j in range(OUT_DIM):            # static unroll, 2 columns
        wj = wt[j:j + 1, :]             # (1, IN_DIM) -> sublane broadcast
        cols.append(jnp.sum(x * wj, axis=-1, keepdims=True))   # (TB, 1)
    y = jnp.concatenate(cols, axis=-1) + bf_ref[...]           # (TB, OUT_DIM)
    o_ref[...] = jnp.maximum(y, 0.0).astype(o_ref.dtype)


def fuse_params(w1, b1, w2, b2):
    """One-time parameter fusion (hoisted out of the forward hot path).

    w1: (MIDDLE_DIM, IN_DIM), b1: (MIDDLE_DIM,),
    w2: (OUT_DIM, MIDDLE_DIM), b2: (OUT_DIM,)
    Returns (W_fused_t (OUT_DIM, IN_DIM), b_fused (1, OUT_DIM)) in f32.
    Computed at HIGHEST precision so the fused weights carry no bf16 error.
    """
    w1 = w1.astype(jnp.float32)
    w2 = w2.astype(jnp.float32)
    wt = jnp.dot(w2, w1, precision=lax.Precision.HIGHEST)       # (OUT, IN)
    bf = (jnp.dot(b1.astype(jnp.float32), w2.T,
                  precision=lax.Precision.HIGHEST)
          + b2.astype(jnp.float32)).reshape(1, OUT_DIM)
    return wt, bf


def _pick_tile(B):
    """Batch-tile size: full array for small batches; otherwise a
    sublane-aligned tile chosen so the tile count is even (balances the two
    v7x TensorCores; a no-op on single-TC v5e/v6e)."""
    if B <= _MAX_TB:
        return B                        # full-dim block (satisfies (8,128) rule)
    n_tiles = pl.cdiv(B, _MAX_TB)
    n_tiles = ((n_tiles + 1) // 2) * 2  # even grid for megacore balance
    tb = pl.cdiv(B, n_tiles)
    return ((tb + 7) // 8) * 8          # multiple of 8 sublanes


@jax.jit
def neural_network_forward(x, w_fused_t, b_fused):
    """x: (B, IN_DIM) f32; w_fused_t: (OUT_DIM, IN_DIM); b_fused: (1, OUT_DIM).
    Returns (B, OUT_DIM) f32 = relu(x @ w_fused_t.T + b_fused)."""
    B = x.shape[0]
    TB = _pick_tile(B)
    grid = (pl.cdiv(B, TB),)

    cost = pl.CostEstimate(
        flops=2 * B * IN_DIM * OUT_DIM,
        transcendentals=0,
        bytes_accessed=4 * (B * IN_DIM + OUT_DIM * IN_DIM + OUT_DIM
                            + B * OUT_DIM),
    )

    return pl.pallas_call(
        _fused_mlp_kernel,
        out_shape=jax.ShapeDtypeStruct((B, OUT_DIM), jnp.float32),
        grid_spec=pl.GridSpec(
            grid=grid,
            in_specs=[
                # x: streamed over the batch; weights/bias constant index ->
                # resident in VMEM across all grid steps.
                pl.BlockSpec((TB, IN_DIM), lambda i: (i, 0)),
                pl.BlockSpec((OUT_DIM, IN_DIM), lambda i: (0, 0)),
                pl.BlockSpec((1, OUT_DIM), lambda i: (0, 0)),
            ],
            out_specs=pl.BlockSpec((TB, OUT_DIM), lambda i: (i, 0)),
        ),
        compiler_params=pltpu.CompilerParams(
            # Batch rows are independent -> shard grid across v7x's 2 TCs.
            dimension_semantics=("parallel",),
            vmem_limit_bytes=_VMEM_LIMIT_BYTES,
        ),
        cost_estimate=cost,
    )(x, w_fused_t, b_fused)


def _init_params(key):
    """Deterministic parameter init mirroring the PyTorch __init__:
    weights ~ Normal(0, 1), biases filled with 0.1."""
    k1, k2 = jax.random.split(key)
    w1 = jax.random.normal(k1, (MIDDLE_DIM, IN_DIM), dtype=jnp.float32)
    b1 = jnp.full((MIDDLE_DIM,), 0.1, dtype=jnp.float32)
    w2 = jax.random.normal(k2, (OUT_DIM, MIDDLE_DIM), dtype=jnp.float32)
    b2 = jnp.full((OUT_DIM,), 0.1, dtype=jnp.float32)
    return w1, b1, w2, b2


def _reference(x, w1, b1, w2, b2):
    """Unfused two-layer reference with exact PyTorch forward semantics,
    at HIGHEST matmul precision so the comparison target is accurate f32."""
    h = jnp.dot(x, w1.T, precision=lax.Precision.HIGHEST) + b1
    y = jnp.dot(h, w2.T, precision=lax.Precision.HIGHEST) + b2
    return jnp.maximum(y, 0.0)


if __name__ == "__main__":
    key = jax.random.PRNGKey(0)
    k_x, k_x2, k_p = jax.random.split(key, 3)

    w1, b1, w2, b2 = _init_params(k_p)
    # One-time fusion, hoisted out of the forward hot path.
    w_fused_t, b_fused = fuse_params(w1, b1, w2, b2)

    # Small batch (single full-array tile).
    B = 8
    x = jax.random.normal(k_x, (B, IN_DIM), dtype=jnp.float32)
    out = jax.block_until_ready(neural_network_forward(x, w_fused_t, b_fused))
    ref = _reference(x, w1, b1, w2, b2)
    assert out.shape == (B, OUT_DIM)
    # Fusion reassociates f32 sums -> small absolute slack relative to the
    # O(1e2) output magnitudes produced by Normal(0,1) weights.
    assert jnp.allclose(out, ref, atol=1e-2, rtol=1e-3)

    # Batch larger than one tile: even grid (2 tiles, balanced across v7x
    # cores), last tile partial.
    B2 = 5000
    x2 = jax.random.normal(k_x2, (B2, IN_DIM), dtype=jnp.float32)
    out2 = jax.block_until_ready(neural_network_forward(x2, w_fused_t, b_fused))
    ref2 = _reference(x2, w1, b1, w2, b2)
    assert out2.shape == (B2, OUT_DIM)
    assert jnp.allclose(out2, ref2, atol=1e-2, rtol=1e-3)

    print("KERNEL_OK")
</pallas_src>

<mosaic_0001>
module attributes {stable_mosaic.version = 11 : i64} {
  func.func @_fused_mlp_kernel(%arg0: i32, %arg1: memref<8x300xf32, #tpu.memory_space<vmem>>, %arg2: memref<2x300xf32, #tpu.memory_space<vmem>>, %arg3: memref<1x2xf32, #tpu.memory_space<vmem>>, %arg4: memref<8x2xf32, #tpu.memory_space<vmem>>) attributes {dimension_semantics = [#tpu.dimension_semantics<parallel>], iteration_bounds = array<i64: 1>, scalar_prefetch = 0 : i64, scratch_operands = 0 : i64, tpu.core_type = #tpu.core_type<tc>, window_params = [{transform_indices = @transform_0, window_bounds = array<i64: 8, 300>}, {pipeline_mode = #tpu.pipeline_mode<synchronous>, transform_indices = @transform_1, window_bounds = array<i64: 2, 300>}, {pipeline_mode = #tpu.pipeline_mode<synchronous>, transform_indices = @transform_2, window_bounds = array<i64: 1, 2>}, {transform_indices = @transform_3, window_bounds = array<i64: 8, 2>}]} {
    %c0 = arith.constant 0 : index
    %c0_0 = arith.constant 0 : index
    %0 = vector.load %arg1[%c0, %c0_0] : memref<8x300xf32, #tpu.memory_space<vmem>>, vector<8x300xf32>
    %c0_1 = arith.constant 0 : index
    %c0_2 = arith.constant 0 : index
    %1 = vector.load %arg2[%c0_1, %c0_2] : memref<2x300xf32, #tpu.memory_space<vmem>>, vector<2x300xf32>
    %2 = vector.extract_strided_slice %1 {offsets = [0, 0], sizes = [1, 300], strides = [1, 1]} : vector<2x300xf32> to vector<1x300xf32>
    %3 = vector.broadcast %2 : vector<1x300xf32> to vector<8x300xf32>
    %4 = arith.mulf %0, %3 : vector<8x300xf32>
    %cst = arith.constant dense<0.000000e+00> : vector<8xf32>
    %5 = vector.multi_reduction <add>, %4, %cst [1] : vector<8x300xf32> to vector<8xf32>
    %6 = vector.shape_cast %5 : vector<8xf32> to vector<8x1xf32>
    %7 = vector.extract_strided_slice %1 {offsets = [1, 0], sizes = [1, 300], strides = [1, 1]} : vector<2x300xf32> to vector<1x300xf32>
    %8 = vector.broadcast %7 : vector<1x300xf32> to vector<8x300xf32>
    %9 = arith.mulf %0, %8 : vector<8x300xf32>
    %cst_3 = arith.constant dense<0.000000e+00> : vector<8xf32>
    %10 = vector.multi_reduction <add>, %9, %cst_3 [1] : vector<8x300xf32> to vector<8xf32>
    %11 = vector.shape_cast %10 : vector<8xf32> to vector<8x1xf32>
    %12 = tpu.concatenate %6, %11 in 1 : vector<8x1xf32>, vector<8x1xf32> -> vector<8x2xf32>
    %c0_4 = arith.constant 0 : index
    %c0_5 = arith.constant 0 : index
    %13 = vector.load %arg3[%c0_4, %c0_5] : memref<1x2xf32, #tpu.memory_space<vmem>>, vector<1x2xf32>
    %14 = vector.broadcast %13 : vector<1x2xf32> to vector<8x2xf32>
    %15 = arith.addf %12, %14 : vector<8x2xf32>
    %cst_6 = arith.constant 0.000000e+00 : f32
    %16 = vector.broadcast %cst_6 : f32 to vector<8x2xf32>
    %17 = arith.maximumf %15, %16 : vector<8x2xf32>
    %c0_7 = arith.constant 0 : index
    %c0_8 = arith.constant 0 : index
    %18 = vector.load %arg4[%c0_7, %c0_8] : memref<8x2xf32, #tpu.memory_space<vmem>>, vector<8x2xf32>
    tpu.vector_store %arg4[%c0_7, %c0_8], %17 {strides = array<i32>} : memref<8x2xf32, #tpu.memory_space<vmem>>, vector<8x2xf32>,
    return
  }
  func.func @transform_0(%arg0: i32) -> (i32, i32) {
    %c0_i32 = arith.constant 0 : i32
    %c0_i32_0 = arith.constant 0 : i32
    return %arg0, %c0_i32 : i32, i32
  }
  func.func @transform_1(%arg0: i32) -> (i32, i32) {
    %c0_i32 = arith.constant 0 : i32
    %c0_i32_0 = arith.constant 0 : i32
    %c0_i32_1 = arith.constant 0 : i32
    return %c0_i32, %c0_i32_0 : i32, i32
  }
  func.func @transform_2(%arg0: i32) -> (i32, i32) {
    %c0_i32 = arith.constant 0 : i32
    %c0_i32_0 = arith.constant 0 : i32
    %c0_i32_1 = arith.constant 0 : i32
    return %c0_i32, %c0_i32_0 : i32, i32
  }
  func.func @transform_3(%arg0: i32) -> (i32, i32) {
    %c0_i32 = arith.constant 0 : i32
    %c0_i32_0 = arith.constant 0 : i32
    return %arg0, %c0_i32 : i32, i32
  }
}

</mosaic_0001>

<llo_original>
// kernel: neural_network_forward.1
$region0: #{neural_network_forward.1}
  #allocation0 [shape = 'u32[]', space=smem, size = 0x4, offset = 0x4, fixed_abs, tag = 'smem constant byte address 0x4 - core index']
  #allocation1 [shape = 'u32[144,128]{1,0:T(1,128)}', space=vmem, size = 0x12000, scoped, tag = 'internal scratch']
  %s0 = inlined_call_operand.hbm [shape: f32[8,300], index: 0, kind: input, shape index: {}]
  %s1 = inlined_call_operand.hbm [shape: f32[2,300], index: 1, kind: input, shape index: {}]
  %s2 = inlined_call_operand.vmem [shape: f32[1,2], index: 2, kind: input, shape index: {}]
  %s3 = inlined_call_operand.vmem [shape: f32[8,2], index: 3, kind: output, shape index: {}]
  %s4 = sld [smem:[#allocation0]]
  $region30: #{neural_network_forward.1} parent=0
    _
  %s6 = ssub.s32 1, %s4
  %s7 = scalar_select 0, %s6, %s4
  $region1: #{neural_network_forward.1} parent=0
    #allocation2 [shape = 'u8[12288]{0}', space=vmem, size = 0x3000, scoped, tag = 'input window, operand 0, single buffered']
    #allocation3 [shape = 's32[1]{0}', space=sflag, size = 0x4, scoped, tag = 'scoped memory for neural_network_forward.1']
    #allocation4 [shape = 'u8[3072]{0}', space=vmem, size = 0xc00, scoped, tag = 'input window, operand 1, single buffered']
    #allocation5 [shape = 's32[1]{0}', space=sflag, size = 0x4, scoped, tag = 'scoped memory for neural_network_forward.1']
    %8 = vsyncpa [#allocation3], 0
    %9 = vsyncpa [#allocation5], 0
    // Predicated region
    $region2: #{neural_network_forward.1} parent=1 // pred_check
      _
    $region3: #{neural_network_forward.1} parent=1 // pred_check_branch
      %11 = sbr.rel (0) target = $region5
    $region4: #{neural_network_forward.1} parent=1 // pred_region
      %s13 = ssub.s32 384, 384
      %14 = vsyncadd [#allocation3], %s13
      %s16 = sshll.u32 [#allocation2], 4
      %s17 = int_to_ptr.vmem [resolvable:$true] %s16
      %19 = dma.hbm_to_vmem [thread:$0]  %s0, 384, %s17, [#allocation3]
    $region5: #{neural_network_forward.1} parent=1 // pred_fallthru
      _
    // Predicated region
    $region6: #{neural_network_forward.1} parent=1 // pred_check
      _
    $region7: #{neural_network_forward.1} parent=1 // pred_check_branch
      %21 = sbr.rel (0) target = $region9
    $region8: #{neural_network_forward.1} parent=1 // pred_region
      %s23 = ssub.s32 96, 96
      %24 = vsyncadd [#allocation5], %s23
      %s26 = sshll.u32 [#allocation4], 4
      %s27 = int_to_ptr.vmem [resolvable:$true] %s26
      %29 = dma.hbm_to_vmem [thread:$0]  %s1, 96, %s27, [#allocation5]
    $region9: #{neural_network_forward.1} parent=1 // pred_fallthru
      _
    // Predicated region
    $region10: #{neural_network_forward.1} parent=1 // pred_check
      _
    $region11: #{neural_network_forward.1} parent=1 // pred_check_branch
      %31 = sbr.rel (0) target = $region13
    $region12: #{neural_network_forward.1} parent=1 // pred_region
      _
    $region13: #{neural_network_forward.1} parent=1 // pred_fallthru
      _
    // Predicated region
    $region14: #{neural_network_forward.1} parent=1 // pred_check
      _
    $region15: #{neural_network_forward.1} parent=1 // pred_check_branch
      %33 = sbr.rel (0) target = $region17
    $region16: #{neural_network_forward.1} parent=1 // pred_region
      %34 = dma.done [#allocation3], 384
    $region17: #{neural_network_forward.1} parent=1 // pred_fallthru
      _
    // Predicated region
    $region18: #{neural_network_forward.1} parent=1 // pred_check
      _
    $region19: #{neural_network_forward.1} parent=1 // pred_check_branch
      %36 = sbr.rel (0) target = $region21
    $region20: #{neural_network_forward.1} parent=1 // pred_region
      %37 = dma.done [#allocation5], 96
    $region21: #{neural_network_forward.1} parent=1 // pred_fallthru
      _
    %v38 = vld [vmem:[#allocation2] sm:$0xff]
    %v39 = vld [vmem:[#allocation2 + $0x8] sm:$0xff]
    %v40 = vld [vmem:[#allocation2 + $0x10] sm:$0xff]
    %v41 = vld [vmem:[#allocation4] sm:$0x3f]
    %v43 = vlaneseq
    %v44 = vshrl.u32 %v43, 7
    %v45 = vsub.s32 0, %v44
    %v46 = vrot.slane %v41, %v45
    %v47 = vlaneseq
    %v48 = vshrl.u32 %v47, 7
    %v49 = vsub.s32 2, %v48
    %v50 = vrot.slane %v41, %v49
    %v51 = vlaneseq
    %v52 = vshrl.u32 %v51, 7
    %v53 = vsub.s32 4, %v52
    %v54 = vrot.slane %v41, %v53
    %v58 = vlaneseq
    %v59 = vshrl.u32 %v58, 7
    %v60 = vsub.s32 0, %v59
    %v61 = vrot.slane %v46, %v60
    %v62 = vlaneseq
    %v63 = vshrl.u32 %v62, 7
    %v64 = vsub.s32 0, %v63
    %v65 = vrot.slane %v50, %v64
    %v66 = vlaneseq
    %v67 = vshrl.u32 %v66, 7
    %v68 = vsub.s32 0, %v67
    %v69 = vrot.slane %v54, %v68
    %v70 = vmul.f32 %v38, %v61
    %v71 = vmul.f32 %v39, %v65
    %v72 = vmul.f32 %v40, %v69
    %v73 = vadd.f32 %v70, %v71
    %vm74 = vcmask 359424
    %v75 = vsel %vm74, %v72, 0.0
    %v76 = vadd.f32 %v73, %v75
    %77 = vadd.xlane.f32.xlu0 %v76
    %v78 = vpop.xlane.xlu0 %77
    %v79 = vlaneseq
    %v80 = vshrl.u32 %v79, 7
    %v81 = vsub.s32 1, %v80
    %v82 = vrot.slane %v41, %v81
    %v83 = vlaneseq
    %v84 = vshrl.u32 %v83, 7
    %v85 = vsub.s32 3, %v84
    %v86 = vrot.slane %v41, %v85
    %v87 = vlaneseq
    %v88 = vshrl.u32 %v87, 7
    %v89 = vsub.s32 5, %v88
    %v90 = vrot.slane %v41, %v89
    %v94 = vlaneseq
    %v95 = vshrl.u32 %v94, 7
    %v96 = vsub.s32 1, %v95
    %v97 = vrot.slane %v82, %v96
    %v98 = vlaneseq
    %v99 = vshrl.u32 %v98, 7
    %v100 = vsub.s32 1, %v99
    %v101 = vrot.slane %v86, %v100
    %v102 = vlaneseq
    %v103 = vshrl.u32 %v102, 7
    %v104 = vsub.s32 1, %v103
    %v105 = vrot.slane %v90, %v104
    %v106 = vmul.f32 %v38, %v97
    %v107 = vmul.f32 %v39, %v101
    %v108 = vmul.f32 %v40, %v105
    %v109 = vadd.f32 %v106, %v107
    %v110 = vsel %vm74, %v108, 0.0
    %v111 = vadd.f32 %v109, %v110
    %112 = vadd.xlane.f32.xlu0 %v111
    %v113 = vpop.xlane.xlu0 %112
    %vm114 = vcmask 7168
    %v115 = vsel %vm114, %v78, %v113
    %v116 = vld [vmem:[%s2] sm:$0x1]
    %v118 = vlaneseq
    %v119 = vshrl.u32 %v118, 7
    %v120 = vsub.s32 0, %v119
    %v121 = vrot.slane %v116, %v120
    %v123 = vadd.f32 %v115, %v121
    %v124 = vmax.f32 %v123, 0.0
    %vm125 = vcmask 15360
    %126 = vst.msk [vmem:[%s3] sm:$0xff] %vm125, %v124
    // Predicated region
    $region22: #{neural_network_forward.1} parent=1 // pred_check
      _
    $region23: #{neural_network_forward.1} parent=1 // pred_check_branch
      %128 = sbr.rel (0) target = $region25
    $region24: #{neural_network_forward.1} parent=1 // pred_region
      _
    $region25: #{neural_network_forward.1} parent=1 // pred_fallthru
      _
    // Predicated region
    $region26: #{neural_network_forward.1} parent=1 // pred_check
      _
    $region27: #{neural_network_forward.1} parent=1 // pred_check_branch
      %130 = sbr.rel (0) target = $region29
    $region28: #{neural_network_forward.1} parent=1 // pred_region
      _
    $region29: #{neural_network_forward.1} parent=1 // pred_fallthru
      _
    %131 = vsyncpa [#allocation3], 1
    %132 = vsyncpa [#allocation5], 1

</llo_original>
